<compile_context>
chip_gen: v6e
topology: v6e:2x2x1
jax: 0.10.0
libtpu: 0.0.40
codegen_flags: <defaults>
</compile_context>

<pallas_src>
import jax
import jax.numpy as jnp
from jax.experimental import pallas as pl
from jax.experimental.pallas import tpu as pltpu


def _spectral_normalize(w2d):
    # PyTorch's spectral_norm estimates sigma via power iteration with
    # persistent u/v; here we use the exact largest singular value
    # (parameter setup, plain JAX). Numerically close, not bit-identical.
    sigma = jnp.linalg.svd(w2d, compute_uv=False)[0]
    return w2d / sigma


# ---------------- gate kernel: tiny, single block, all batch elements -------


def _gate_kernel(x_ref, w1_ref, w2_ref, g_ref):
    # x_ref : (N, C_in*16)      pooled feat_small, flattened
    # w1_ref: (C_in*16, C_out)  spectral-normed 4x4 conv weight (transposed)
    # w2_ref: (C_out, C_out)    spectral-normed 1x1 conv weight, [in, out]
    # g_ref : (N, C_out)        sigmoid gate (f32)
    h = jnp.dot(x_ref[...], w1_ref[...], preferred_element_type=jnp.float32)
    h = h * jax.nn.sigmoid(h)                                   # Swish
    g = jnp.dot(h, w2_ref[...], preferred_element_type=jnp.float32)
    g_ref[...] = jax.nn.sigmoid(g)


# ---------------- scaling kernel: pure elementwise, HBM-bound ---------------


def _scale_kernel(g_ref, fb_ref, out_ref):
    # g_ref  : (TR, 1)   f32 per-row gate (row = (n, channel)), lane-broadcast
    # fb_ref : (TR, TS)  feat_big tile, spatial dim in lanes
    # f32 multiply is free (VPU slack in an HBM-bound kernel); cast at store.
    out_ref[...] = (fb_ref[...] * g_ref[...]).astype(out_ref.dtype)


def _round_up(x, m):
    return ((x + m - 1) // m) * m


def _sublane_unit(dtype):
    # Native packed tiling: (8,128) for f32, (16,128) for bf16, (32,128) int8/fp8.
    return max(8, 32 // jnp.dtype(dtype).itemsize)


def _pick_tile(full, unit, cap):
    """Largest multiple of `unit` <= min(full, cap); `full` is unit-aligned."""
    return max(unit, min(full, (cap // unit) * unit))


def se_block(feat_small, feat_big, w1, w2):
    """feat_small: (N,C_in,Hs,Ws)  feat_big: (N,C_out,Hb,Wb) -> (N,C_out,Hb,Wb)"""
    N, C_in, Hs, Ws = feat_small.shape
    Nb, C_out, Hb, Wb = feat_big.shape
    assert N == Nb
    # TODO(synk): general AdaptiveAvgPool2d bins for Hs/Ws not divisible by 4
    assert Hs % 4 == 0 and Ws % 4 == 0
    bh, bw = Hs // 4, Ws // 4

    # ---- parameter setup (plain JAX): exact spectral norm, no weight inflation
    w1n = _spectral_normalize(w1.reshape(C_out, -1))            # (C_out, C_in*16)
    w2n = _spectral_normalize(w2.reshape(C_out, C_out))
    w1m = w1n.T.astype(jnp.float32)                             # (C_in*16, C_out)
    w2m = w2n.T.astype(jnp.float32)                             # (C_out, C_out)

    # ---- AdaptiveAvgPool2d(4): cheap bandwidth-bound reduce, done by XLA
    pooled = feat_small.reshape(N, C_in, 4, bh, 4, bw).mean(axis=(3, 5))
    pooled = pooled.reshape(N, C_in * 16).astype(jnp.float32)   # (N, C_in*16)

    # ---- gate for all N at once: tiny single-block kernel, VMEM-pinned specs
    gate = pl.pallas_call(
        _gate_kernel,
        out_shape=jax.ShapeDtypeStruct((N, C_out), jnp.float32),
        in_specs=[pl.BlockSpec(memory_space=pltpu.MemorySpace.VMEM)] * 3,
        out_specs=pl.BlockSpec(memory_space=pltpu.MemorySpace.VMEM),
    )(pooled, w1m, w2m)

    # ---- scaling: feat_big viewed as (N*C_out, Hb*Wb); reshapes are free
    R, S = N * C_out, Hb * Wb
    itemsize = jnp.dtype(feat_big.dtype).itemsize
    unit_r = _sublane_unit(feat_big.dtype)

    # Pad to (unit_r, 128) multiples so tiles stay bounded and stores unmasked
    # (replaces the old full-extent fallback that could blow VMEM).
    R_pad, S_pad = _round_up(R, unit_r), _round_up(S, 128)

    fb2 = feat_big.reshape(R, S)                                # NCHW-contiguous view
    g2 = gate.reshape(R, 1)                                     # keep f32 into kernel
    if R_pad != R or S_pad != S:
        fb2 = jnp.pad(fb2, ((0, R_pad - R), (0, S_pad - S)))
        g2 = jnp.pad(g2, ((0, R_pad - R), (0, 0)))

    # ~4 MiB tiles: amortize the ~0.35 us/step pipeline overhead while keeping
    # the double-buffered footprint (~16 MiB) well under the 48 MiB VMEM limit.
    TS = _pick_tile(S_pad, 128, 4096)                           # lane tile
    tr_cap = max(unit_r, ((4 << 20) // (TS * itemsize)) // unit_r * unit_r)
    TR = _pick_tile(R_pad, unit_r, tr_cap)                      # sublane tile

    grid_r, grid_s = pl.cdiv(R_pad, TR), pl.cdiv(S_pad, TS)
    if grid_r >= 2 or grid_s < 2:
        grid = (grid_r, grid_s)
        g_spec = pl.BlockSpec((TR, 1), lambda i, j: (i, 0))
        fb_spec = pl.BlockSpec((TR, TS), lambda i, j: (i, j))
        o_spec = pl.BlockSpec((TR, TS), lambda i, j: (i, j))
    else:
        # Single row-tile: lead with the many-tile spatial axis so v7x megacore
        # sharding splits it across both TensorCores.
        grid = (grid_s, grid_r)
        g_spec = pl.BlockSpec((TR, 1), lambda j, i: (i, 0))
        fb_spec = pl.BlockSpec((TR, TS), lambda j, i: (i, j))
        o_spec = pl.BlockSpec((TR, TS), lambda j, i: (i, j))

    out2 = pl.pallas_call(
        _scale_kernel,
        out_shape=jax.ShapeDtypeStruct((R_pad, S_pad), feat_big.dtype),
        grid=grid,
        in_specs=[g_spec, fb_spec],
        out_specs=o_spec,
        compiler_params=pltpu.CompilerParams(
            dimension_semantics=("parallel", "parallel"),
            vmem_limit_bytes=48 << 20),
    )(g2, fb2)

    return out2[:R, :S].reshape(N, C_out, Hb, Wb)


def se_block_reference(feat_small, feat_big, w1, w2):
    """Pure-JAX reference mirroring the PyTorch module (for correctness check)."""
    N, C_in, Hs, Ws = feat_small.shape
    _, C_out, _, _ = feat_big.shape
    bh, bw = Hs // 4, Ws // 4
    w1n = _spectral_normalize(w1.reshape(C_out, -1)).reshape(C_out, C_in, 4, 4)
    w2n = _spectral_normalize(w2.reshape(C_out, C_out))
    pooled = feat_small.reshape(N, C_in, 4, bh, 4, bw).mean(axis=(3, 5))   # AdaptiveAvgPool2d(4)
    h = jnp.einsum("ncpq,ocpq->no", pooled, w1n)                           # 4x4 conv, no bias
    h = h * jax.nn.sigmoid(h)                                              # Swish
    g = jax.nn.sigmoid(jnp.einsum("nc,oc->no", h, w2n))                    # 1x1 conv + Sigmoid
    return feat_big * g[:, :, None, None]


if __name__ == "__main__":
    key = jax.random.PRNGKey(0)
    k1, k2, k3, k4 = jax.random.split(key, 4)

    N, C_in, C_out = 2, 4, 8
    Hs, Ws = 16, 16           # feat_small spatial (divisible by 4)
    Hb, Wb = 32, 32           # feat_big spatial

    feat_small = jax.random.normal(k1, (N, C_in, Hs, Ws), dtype=jnp.float32)
    feat_big = jax.random.normal(k2, (N, C_out, Hb, Wb), dtype=jnp.float32)
    # Conv weight shapes from the module's __init__ (deterministic synthetic init)
    w1 = 0.1 * jax.random.normal(k3, (C_out, C_in, 4, 4), dtype=jnp.float32)
    w2 = 0.1 * jax.random.normal(k4, (C_out, C_out, 1, 1), dtype=jnp.float32)

    out = se_block(feat_small, feat_big, w1, w2)
    jax.block_until_ready(out)

    ref = se_block_reference(feat_small, feat_big, w1, w2)
    assert out.shape == feat_big.shape
    assert out.dtype == feat_big.dtype
    assert jnp.allclose(out, ref, rtol=1e-5, atol=1e-5), "mismatch vs reference"

    print("KERNEL_OK")
</pallas_src>

<mosaic_0001>
module attributes {stable_mosaic.version = 11 : i64} {
  func.func @_gate_kernel(%arg0: memref<2x64xf32, #tpu.memory_space<vmem>>, %arg1: memref<64x8xf32, #tpu.memory_space<vmem>>, %arg2: memref<8x8xf32, #tpu.memory_space<vmem>>, %arg3: memref<2x8xf32, #tpu.memory_space<vmem>>) attributes {dimension_semantics = [], scalar_prefetch = 0 : i64, scratch_operands = 0 : i64, tpu.core_type = #tpu.core_type<tc>} {
    %c0 = arith.constant 0 : index
    %c0_0 = arith.constant 0 : index
    %0 = vector.load %arg0[%c0, %c0_0] : memref<2x64xf32, #tpu.memory_space<vmem>>, vector<2x64xf32>
    %c0_1 = arith.constant 0 : index
    %c0_2 = arith.constant 0 : index
    %1 = vector.load %arg1[%c0_1, %c0_2] : memref<64x8xf32, #tpu.memory_space<vmem>>, vector<64x8xf32>
    %cst = arith.constant dense<0.000000e+00> : vector<2x8xf32>
    %2 = tpu.matmul %0, %1, %cst {dimension_numbers = #tpu.dot_dimension_numbers<[1], [0], [0], [1], [0, 0, 1, 1], [], []>} : vector<2x64xf32>, vector<64x8xf32>, vector<2x8xf32> -> vector<2x8xf32>
    %3 = arith.negf %2 : vector<2x8xf32>
    %4 = math.exp %3 : vector<2x8xf32>
    %cst_3 = arith.constant 1.000000e+00 : f32
    %5 = vector.broadcast %cst_3 : f32 to vector<2x8xf32>
    %6 = arith.addf %5, %4 : vector<2x8xf32>
    %7 = arith.divf %5, %6 : vector<2x8xf32>
    %8 = arith.mulf %2, %7 : vector<2x8xf32>
    %c0_4 = arith.constant 0 : index
    %c0_5 = arith.constant 0 : index
    %9 = vector.load %arg2[%c0_4, %c0_5] : memref<8x8xf32, #tpu.memory_space<vmem>>, vector<8x8xf32>
    %cst_6 = arith.constant dense<0.000000e+00> : vector<2x8xf32>
    %10 = tpu.matmul %8, %9, %cst_6 {dimension_numbers = #tpu.dot_dimension_numbers<[1], [0], [0], [1], [0, 0, 1, 1], [], []>} : vector<2x8xf32>, vector<8x8xf32>, vector<2x8xf32> -> vector<2x8xf32>
    %11 = arith.negf %10 : vector<2x8xf32>
    %12 = math.exp %11 : vector<2x8xf32>
    %cst_7 = arith.constant 1.000000e+00 : f32
    %13 = vector.broadcast %cst_7 : f32 to vector<2x8xf32>
    %14 = arith.addf %13, %12 : vector<2x8xf32>
    %15 = arith.divf %13, %14 : vector<2x8xf32>
    %c0_8 = arith.constant 0 : index
    %c0_9 = arith.constant 0 : index
    %16 = vector.load %arg3[%c0_8, %c0_9] : memref<2x8xf32, #tpu.memory_space<vmem>>, vector<2x8xf32>
    tpu.vector_store %arg3[%c0_8, %c0_9], %15 {strides = array<i32>} : memref<2x8xf32, #tpu.memory_space<vmem>>, vector<2x8xf32>,
    return
  }
}

</mosaic_0001>

<llo_original>
// kernel: tpu_custom_call.1
$region0: #{tpu_custom_call.1}
  #allocation0 [shape = 'u32[]', space=smem, size = 0x4, offset = 0x4, fixed_abs, tag = 'smem constant byte address 0x4 - core index']
  #allocation1 [shape = 'u32[144,128]{1,0:T(1,128)}', space=vmem, size = 0x12000, scoped, tag = 'internal scratch']
  %s0 = inlined_call_operand.vmem [shape: f32[2,64], index: 0, kind: input, shape index: {}]
  %s1 = inlined_call_operand.vmem [shape: f32[64,8], index: 1, kind: input, shape index: {}]
  %s2 = inlined_call_operand.vmem [shape: f32[8,8], index: 2, kind: input, shape index: {}]
  %s3 = inlined_call_operand.hbm [shape: f32[2,8], index: 3, kind: output, shape index: {}]
  %s4 = sld [smem:[#allocation0]]
  $region22: #{tpu_custom_call.1} parent=0
    _
  %s6 = ssub.s32 1, %s4
  %s7 = scalar_select 0, %s6, %s4
  $region1: #{tpu_custom_call.1} parent=0
    #allocation2 [shape = 'u8[1024]{0}', space=vmem, size = 0x400, scoped, tag = 'output window, operand 0, single buffered']
    #allocation3 [shape = 's32[1]{0}', space=sflag, size = 0x4, scoped, tag = 'scoped memory for tpu_custom_call.1']
    %8 = vsyncpa [#allocation3], 0
    // Predicated region
    $region2: #{tpu_custom_call.1} parent=1 // pred_check
      _
    $region3: #{tpu_custom_call.1} parent=1 // pred_check_branch
      %10 = sbr.rel (0) target = $region5
    $region4: #{tpu_custom_call.1} parent=1 // pred_region
      _
    $region5: #{tpu_custom_call.1} parent=1 // pred_fallthru
      _
    // Predicated region
    $region6: #{tpu_custom_call.1} parent=1 // pred_check
      _
    $region7: #{tpu_custom_call.1} parent=1 // pred_check_branch
      %12 = sbr.rel (0) target = $region9
    $region8: #{tpu_custom_call.1} parent=1 // pred_region
      _
    $region9: #{tpu_custom_call.1} parent=1 // pred_fallthru
      _
    // Predicated region
    $region10: #{tpu_custom_call.1} parent=1 // pred_check
      _
    $region11: #{tpu_custom_call.1} parent=1 // pred_check_branch
      %14 = sbr.rel (0) target = $region13
    $region12: #{tpu_custom_call.1} parent=1 // pred_region
      _
    $region13: #{tpu_custom_call.1} parent=1 // pred_fallthru
      _
    %v15 = vld [vmem:[%s0] sm:$0x3]
    %v16 = vld [vmem:[%s1] sm:$0xff]
    %v17 = vld [vmem:[%s1 + $0x8] sm:$0xff]
    %v18 = vld [vmem:[%s1 + $0x10] sm:$0xff]
    %v19 = vld [vmem:[%s1 + $0x18] sm:$0xff]
    %v20 = vld [vmem:[%s1 + $0x20] sm:$0xff]
    %v21 = vld [vmem:[%s1 + $0x28] sm:$0xff]
    %v22 = vld [vmem:[%s1 + $0x30] sm:$0xff]
    %v23 = vld [vmem:[%s1 + $0x38] sm:$0xff]
    %vm24 = vcmask 523264
    %v26 = vsel %vm24, %v15, 0
    %28 = vmatprep.subr.mxu0 0.0
    %29 = vmatpush1.msra.mxu0 0.0
    %30 = vmatprep.subr.mxu0 0.0
    %31 = vmatpush1.msra.mxu0 0.0
    %32 = vmatprep.subr.mxu0 0.0
    %33 = vmatpush1.msra.mxu0 0.0
    %34 = vmatprep.subr.mxu0 0.0
    %35 = vmatpush1.msra.mxu0 0.0
    %36 = vmatprep.subr.mxu0 0.0
    %37 = vmatpush1.msra.mxu0 0.0
    %38 = vmatprep.subr.mxu0 0.0
    %39 = vmatpush1.msra.mxu0 0.0
    %40 = vmatprep.subr.mxu0 0.0
    %41 = vmatpush1.msra.mxu0 0.0
    %42 = vmatprep.subr.mxu0 0.0
    %43 = vmatpush1.msra.mxu0 0.0
    %44 = vmatprep.subr.mxu0 0.0
    %45 = vmatpush1.msra.mxu0 %v23
    %46 = vmatprep.subr.mxu0 0.0
    %47 = vmatpush1.msra.mxu0 %v22
    %48 = vmatprep.subr.mxu0 0.0
    %49 = vmatpush1.msra.mxu0 %v21
    %50 = vmatprep.subr.mxu0 0.0
    %51 = vmatpush1.msra.mxu0 %v20
    %52 = vmatprep.subr.mxu0 0.0
    %53 = vmatpush1.msra.mxu0 %v19
    %54 = vmatprep.subr.mxu0 0.0
    %55 = vmatpush1.msra.mxu0 %v18
    %56 = vmatprep.subr.mxu0 0.0
    %57 = vmatpush1.msra.mxu0 %v17
    %58 = vmatprep.subr.mxu0 0.0
    %59 = vmatpush1.msra.mxu0 %v16
    %60 = vmatprep.subr.mxu0 0.0
    %61 = vmatpush2.msra.mxu0 0.0
    %62 = vmatprep.subr.mxu0 0.0
    %63 = vmatpush2.msra.mxu0 0.0
    %64 = vmatprep.subr.mxu0 0.0
    %65 = vmatpush2.msra.mxu0 0.0
    %66 = vmatprep.subr.mxu0 0.0
    %67 = vmatpush2.msra.mxu0 0.0
    %68 = vmatprep.subr.mxu0 0.0
    %69 = vmatpush2.msra.mxu0 0.0
    %70 = vmatprep.subr.mxu0 0.0
    %71 = vmatpush2.msra.mxu0 0.0
    %72 = vmatprep.subr.mxu0 0.0
    %73 = vmatpush2.msra.mxu0 0.0
    %74 = vmatprep.subr.mxu0 0.0
    %75 = vmatpush2.msra.mxu0 0.0
    %76 = vmatprep.subr.mxu0 0.0
    %77 = vmatpush2.msra.mxu0 0.0
    %78 = vmatprep.subr.mxu0 0.0
    %79 = vmatpush2.msra.mxu0 0.0
    %80 = vmatprep.subr.mxu0 0.0
    %81 = vmatpush2.msra.mxu0 0.0
    %82 = vmatprep.subr.mxu0 0.0
    %83 = vmatpush2.msra.mxu0 0.0
    %84 = vmatprep.subr.mxu0 0.0
    %85 = vmatpush2.msra.mxu0 0.0
    %86 = vmatprep.subr.mxu0 0.0
    %87 = vmatpush2.msra.mxu0 0.0
    %88 = vmatprep.subr.mxu0 0.0
    %89 = vmatpush2.msra.mxu0 0.0
    %90 = vmatprep.subr.mxu0 0.0
    %91 = vmatpush2.msra.mxu0 0.0
    %92 = vmatprep.mubr.f32.mxu0 0.0
    %93 = vmatmul.mubr.f32.gmra.mxu0 %v26
    %v94 = vpop.f32.mrf.mxu0
    %v95 = vadd.f32 0.0, %v94
    %v96 = vpop.f32.mrf.mxu0
    %97 = vdwg.mxu0
    %v98 = vxor.u32 %v95, 2147483648
    %v99 = vmul.f32 %v98, 1.442695
    %v100 = vpow.pop %v99
    %v101 = vadd.f32 %v100, 1.0
    %v102 = vrcp.pop %v101
    %v103 = vmul.f32 1.0, %v102
    %v104 = vmul.f32 %v95, %v103
    %v105 = vld [vmem:[%s2] sm:$0xff]
    %vm106 = vcmask 64512
    %v108 = vsel %vm106, %v104, 0
    %110 = vmatprep.subr.mxu0 0.0
    %111 = vmatpush1.msra.mxu0 0.0
    %112 = vmatprep.subr.mxu0 0.0
    %113 = vmatpush1.msra.mxu0 0.0
    %114 = vmatprep.subr.mxu0 0.0
    %115 = vmatpush1.msra.mxu0 0.0
    %116 = vmatprep.subr.mxu0 0.0
    %117 = vmatpush1.msra.mxu0 0.0
    %118 = vmatprep.subr.mxu0 0.0
    %119 = vmatpush1.msra.mxu0 0.0
    %120 = vmatprep.subr.mxu0 0.0
    %121 = vmatpush1.msra.mxu0 0.0
    %122 = vmatprep.subr.mxu0 0.0
    %123 = vmatpush1.msra.mxu0 0.0
    %124 = vmatprep.subr.mxu0 0.0
    %125 = vmatpush1.msra.mxu0 0.0
    %126 = vmatprep.subr.mxu0 0.0
    %127 = vmatpush1.msra.mxu0 0.0
    %128 = vmatprep.subr.mxu0 0.0
    %129 = vmatpush1.msra.mxu0 0.0
    %130 = vmatprep.subr.mxu0 0.0
    %131 = vmatpush1.msra.mxu0 0.0
    %132 = vmatprep.subr.mxu0 0.0
    %133 = vmatpush1.msra.mxu0 0.0
    %134 = vmatprep.subr.mxu0 0.0
    %135 = vmatpush1.msra.mxu0 0.0
    %136 = vmatprep.subr.mxu0 0.0
    %137 = vmatpush1.msra.mxu0 0.0
    %138 = vmatprep.subr.mxu0 0.0
    %139 = vmatpush1.msra.mxu0 0.0
    %140 = vmatprep.subr.mxu0 0.0
    %141 = vmatpush1.msra.mxu0 %v105
    %142 = vmatprep.subr.mxu0 0.0
    %143 = vmatpush2.msra.mxu0 0.0
    %144 = vmatprep.subr.mxu0 0.0
    %145 = vmatpush2.msra.mxu0 0.0
    %146 = vmatprep.subr.mxu0 0.0
    %147 = vmatpush2.msra.mxu0 0.0
    %148 = vmatprep.subr.mxu0 0.0
    %149 = vmatpush2.msra.mxu0 0.0
    %150 = vmatprep.subr.mxu0 0.0
    %151 = vmatpush2.msra.mxu0 0.0
    %152 = vmatprep.subr.mxu0 0.0
    %153 = vmatpush2.msra.mxu0 0.0
    %154 = vmatprep.subr.mxu0 0.0
    %155 = vmatpush2.msra.mxu0 0.0
    %156 = vmatprep.subr.mxu0 0.0
    %157 = vmatpush2.msra.mxu0 0.0
    %158 = vmatprep.subr.mxu0 0.0
    %159 = vmatpush2.msra.mxu0 0.0
    %160 = vmatprep.subr.mxu0 0.0
    %161 = vmatpush2.msra.mxu0 0.0
    %162 = vmatprep.subr.mxu0 0.0
    %163 = vmatpush2.msra.mxu0 0.0
    %164 = vmatprep.subr.mxu0 0.0
    %165 = vmatpush2.msra.mxu0 0.0
    %166 = vmatprep.subr.mxu0 0.0
    %167 = vmatpush2.msra.mxu0 0.0
    %168 = vmatprep.subr.mxu0 0.0
    %169 = vmatpush2.msra.mxu0 0.0
    %170 = vmatprep.subr.mxu0 0.0
    %171 = vmatpush2.msra.mxu0 0.0
    %172 = vmatprep.subr.mxu0 0.0
    %173 = vmatpush2.msra.mxu0 0.0
    %174 = vmatprep.mubr.f32.mxu0 0.0
    %175 = vmatmul.mubr.f32.gmra.mxu0 %v108
    %v176 = vpop.f32.mrf.mxu0
    %v177 = vadd.f32 0.0, %v176
    %v178 = vpop.f32.mrf.mxu0
    %179 = vdwg.mxu0
    %v180 = vxor.u32 %v177, 2147483648
    %v181 = vmul.f32 %v180, 1.442695
    %v182 = vpow.pop %v181
    %v183 = vadd.f32 %v182, 1.0
    %v184 = vrcp.pop %v183
    %v185 = vmul.f32 1.0, %v184
    %vm186 = vcmask 58368
    %187 = vst.msk [vmem:[#allocation2] sm:$0x3] %vm186, %v185
    // Predicated region
    $region14: #{tpu_custom_call.1} parent=1 // pred_check
      _
    $region15: #{tpu_custom_call.1} parent=1 // pred_check_branch
      %189 = sbr.rel (0) target = $region17
    $region16: #{tpu_custom_call.1} parent=1 // pred_region
      %s191 = ssub.s32 32, 32
      %192 = vsyncadd [#allocation3], %s191
      %s194 = sshll.u32 [#allocation2], 4
      %s195 = int_to_ptr.vmem [resolvable:$true] %s194
      %197 = dma.vmem_to_hbm [thread:$0]  %s195, 32, %s3, [#allocation3]
    $region17: #{tpu_custom_call.1} parent=1 // pred_fallthru
      _
    // Predicated region
    $region18: #{tpu_custom_call.1} parent=1 // pred_check
      _
    $region19: #{tpu_custom_call.1} parent=1 // pred_check_branch
      %199 = sbr.rel (0) target = $region21
    $region20: #{tpu_custom_call.1} parent=1 // pred_region
      %200 = dma.done [#allocation3], 32
    $region21: #{tpu_custom_call.1} parent=1 // pred_fallthru
      _
    %201 = vsyncpa [#allocation3], 1

</llo_original>
